<compile_context>
chip_gen: v5e
topology: v5e:2x2
jax: 0.10.0
libtpu: 0.0.40
codegen_flags: <defaults>
</compile_context>

<pallas_src>
import math

import numpy as np
import jax
import jax.numpy as jnp
from jax.experimental import pallas as pl
from jax.experimental.pallas import tpu as pltpu


_LANE = 128
_SUBLANE = 8
_MAX_TILE = 512        # ~85% of HBM roofline at 512-lane tiles; fits all gens
_WASTE_BUDGET = 1.25   # allowed padded/useful byte ratio when picking the tile
_NUM_CHUNKS = 2        # v7x has 2 TensorCores; harmless on single-TC v5e/v6e


def _round_up(x, m):
    return ((x + m - 1) // m) * m


# ---------------------------------------------------------------------------
# Pallas kernel
# ---------------------------------------------------------------------------
# grid = (chunk, tile-within-chunk). One grid step = one (hnet, w3-column-tile)
# pair from the scalar-prefetched flat schedule:
#   hid[s]  : which hypernetwork (selects w1/b1/w2/b2 via the index maps)
#   cblk[s] : which `tile`-wide column block of the concatenated w3/b3/output
#   rcmp[s] : 1 -> (re)compute layers 1-2 into the h2 VMEM scratch
#             (first tile of a hnet on this core), 0 -> reuse the carried h2
def _hnet_kernel(hid_ref, cblk_ref, rcmp_ref,
                 x_ref, w1_ref, b1_ref, w2_ref, b2_ref, w3_ref, b3_ref,
                 o_ref, h2_ref):
    step = pl.program_id(0) * pl.num_programs(1) + pl.program_id(1)

    @pl.when(rcmp_ref[step] == 1)
    def _():
        xb = x_ref[...].astype(jnp.bfloat16)
        h1 = jnp.dot(xb, w1_ref[...], preferred_element_type=jnp.float32)
        h1 = jnp.maximum(h1 + b1_ref[...], 0.0)
        h2 = jnp.dot(h1.astype(jnp.bfloat16), w2_ref[...],
                     preferred_element_type=jnp.float32)
        h2_ref[...] = jnp.maximum(h2 + b2_ref[...], 0.0)

    o = jnp.dot(h2_ref[...].astype(jnp.bfloat16), w3_ref[...],
                preferred_element_type=jnp.float32)
    o_ref[...] = (o + b3_ref[...]).astype(o_ref.dtype)


# ---------------------------------------------------------------------------
# Parameter initialization (mirrors the PyTorch init scheme, deterministic)
# ---------------------------------------------------------------------------
def _default_linear_init(kw, kb, fan_in, fan_out):
    # nn.Linear default: U(-1/sqrt(fan_in), 1/sqrt(fan_in))
    bound = 1.0 / math.sqrt(fan_in)
    w = jax.random.uniform(kw, (fan_in, fan_out), jnp.float32, -bound, bound)
    b = jax.random.uniform(kb, (1, fan_out), jnp.float32, -bound, bound)
    return w, b


def init_hnet_params(key, in_size, hidden_size, out_shape):
    """Linear(in,H)+ReLU, Linear(H,H)+ReLU, Linear(H, prod(out_shape))."""
    out_size = int(np.prod(out_shape))
    k = jax.random.split(key, 6)
    w1, b1 = _default_linear_init(k[0], k[1], in_size, hidden_size)
    w2, b2 = _default_linear_init(k[2], k[3], hidden_size, hidden_size)
    # final layer: kaiming_normal_(fan_in, relu) / 100
    std = math.sqrt(2.0 / hidden_size)
    w3 = jax.random.normal(k[4], (hidden_size, out_size), jnp.float32) * std / 100.0
    if len(out_shape) == 1:
        bound = 1.0 / hidden_size          # hyper_bias_init
    else:
        bound = 1.0 / out_shape[-1]        # hyper_weight_init
    b3 = jax.random.uniform(k[5], (1, out_size), jnp.float32, -bound, bound)
    return (w1, b1, w2, b2, w3, b3)


# ---------------------------------------------------------------------------
# JAX/Pallas HyperNetwork (hidden_layers=1)
# ---------------------------------------------------------------------------
class HyperNetworkPallas:

    def __init__(self, key, weight_shapes, bias_shapes, in_size, hidden_size=32,
                 max_tile=_MAX_TILE):
        assert len(weight_shapes) == len(bias_shapes)
        self.in_size = int(in_size)
        self.hidden_size = int(hidden_size)

        # nn.ModuleList order: weight hnet, bias hnet, weight hnet, bias hnet, ...
        self.out_shapes = []
        for ws, bs in zip(weight_shapes, bias_shapes):
            self.out_shapes.append(tuple(ws))
            self.out_shapes.append(tuple(bs))
        self.out_sizes = [int(np.prod(s)) for s in self.out_shapes]
        self.n_hnets = len(self.out_shapes)

        keys = jax.random.split(key, self.n_hnets)
        self.params = [init_hnet_params(k, in_size, hidden_size, s)
                       for k, s in zip(keys, self.out_shapes)]

        # ---- slot-tile selection: biggest tile within the waste budget ----
        tile = max_tile
        base = sum(_round_up(o, _LANE) for o in self.out_sizes)
        while tile > _LANE and (sum(_round_up(o, tile) for o in self.out_sizes)
                                > _WASTE_BUDGET * base):
            tile //= 2
        self.tile = tile
        self.slots = [_round_up(o, tile) for o in self.out_sizes]
        self.padded_total = sum(self.slots)
        self.needs_col_compact = any(s != o for s, o in zip(self.slots, self.out_sizes))

        # ---- flat (hnet, tile) schedule split into tile-balanced chunks ----
        n_tiles = [s // tile for s in self.slots]
        col_start = np.concatenate([[0], np.cumsum(n_tiles)])[:-1].astype(np.int64)
        hid, cblk = [], []
        for i, nti in enumerate(n_tiles):
            for j in range(nti):
                hid.append(i)
                cblk.append(int(col_start[i]) + j)
        total_tiles = len(hid)
        num_chunks = _NUM_CHUNKS if total_tiles >= 2 * _NUM_CHUNKS else 1
        tpc = -(-total_tiles // num_chunks)          # tiles per chunk (ceil)
        pad = num_chunks * tpc - total_tiles
        hid += [hid[-1]] * pad    # padded steps harmlessly redo the last tile
        cblk += [cblk[-1]] * pad
        rcmp = []
        for k in range(len(hid)):
            first_in_chunk = (k % tpc == 0)
            changed = k > 0 and hid[k] != hid[k - 1]
            rcmp.append(1 if (first_in_chunk or changed) else 0)
        self.num_chunks = num_chunks
        self.tiles_per_chunk = tpc
        self.hid = jnp.asarray(hid, jnp.int32)
        self.cblk = jnp.asarray(cblk, jnp.int32)
        self.rcmp = jnp.asarray(rcmp, jnp.int32)

        # ---- stacked / concatenated params (weights bf16, biases f32) ----
        self.w1s = jnp.stack([p[0] for p in self.params]).astype(jnp.bfloat16)  # [N,in,H]
        self.b1s = jnp.stack([p[1] for p in self.params])                       # [N,1,H]
        self.w2s = jnp.stack([p[2] for p in self.params]).astype(jnp.bfloat16)  # [N,H,H]
        self.b2s = jnp.stack([p[3] for p in self.params])                       # [N,1,H]
        # final-layer weights/biases concatenated along lanes, per-hnet padded
        # only up to its own slot (multiple of `tile`)
        self.w3c = jnp.concatenate(
            [jnp.pad(p[4], ((0, 0), (0, s - o)))
             for p, s, o in zip(self.params, self.slots, self.out_sizes)],
            axis=1).astype(jnp.bfloat16)                                         # [H,S]
        self.b3c = jnp.concatenate(
            [jnp.pad(p[5], ((0, 0), (0, s - o)))
             for p, s, o in zip(self.params, self.slots, self.out_sizes)],
            axis=1)                                                              # [1,S]

        # static map: padded slot layout -> exact torch.cat(dim=1) layout
        offs = np.concatenate([[0], np.cumsum(self.slots)])[:-1]
        self.gather_idx = jnp.asarray(
            np.concatenate([off + np.arange(o, dtype=np.int64)
                            for off, o in zip(offs, self.out_sizes)]).astype(np.int32))

        self._jit_forward = jax.jit(self._make_forward())

    # ------------------------------------------------------------------
    def _make_forward(self):
        in_size = self.in_size
        H = self.hidden_size
        tile = self.tile
        nc = self.num_chunks
        nt = self.tiles_per_chunk
        S = self.padded_total
        needs_compact = self.needs_col_compact

        def forward(x, hid, cblk, rcmp, w1s, b1s, w2s, b2s, w3c, b3c, gidx):
            B = x.shape[0]
            Bp = _round_up(max(B, 1), _SUBLANE)      # pad batch to f32 sublane tile
            if Bp != B:
                x = jnp.pad(x, ((0, Bp - B), (0, 0)))

            def flat(c, t):
                return c * nt + t

            grid_spec = pltpu.PrefetchScalarGridSpec(
                num_scalar_prefetch=3,
                grid=(nc, nt),
                in_specs=[
                    # x is shared by every hnet; block index never changes
                    pl.BlockSpec((Bp, in_size),
                                 lambda c, t, hid, cblk, rcmp: (0, 0)),
                    # per-hnet layer-1/2 params, selected by hid[step]; DMA is
                    # skipped for all but the first tile of each hnet because
                    # the block index is unchanged between those steps.
                    pl.BlockSpec((None, in_size, H),
                                 lambda c, t, hid, cblk, rcmp: (hid[flat(c, t)], 0, 0)),
                    pl.BlockSpec((None, 1, H),
                                 lambda c, t, hid, cblk, rcmp: (hid[flat(c, t)], 0, 0)),
                    pl.BlockSpec((None, H, H),
                                 lambda c, t, hid, cblk, rcmp: (hid[flat(c, t)], 0, 0)),
                    pl.BlockSpec((None, 1, H),
                                 lambda c, t, hid, cblk, rcmp: (hid[flat(c, t)], 0, 0)),
                    # one lane tile of the concatenated final-layer weight/bias
                    pl.BlockSpec((H, tile),
                                 lambda c, t, hid, cblk, rcmp: (0, cblk[flat(c, t)])),
                    pl.BlockSpec((1, tile),
                                 lambda c, t, hid, cblk, rcmp: (0, cblk[flat(c, t)])),
                ],
                out_specs=pl.BlockSpec((Bp, tile),
                                       lambda c, t, hid, cblk, rcmp: (0, cblk[flat(c, t)])),
                scratch_shapes=[pltpu.VMEM((Bp, H), jnp.float32)],   # h2 carry
            )

            # explicit scoped-VMEM budget: 2x-buffered blocks + scratch + slack,
            # clamped so it also fits v7x's 64 MiB physical VMEM.
            blk_bytes = (Bp * in_size * 4 + in_size * H * 2 + H * 4
                         + H * H * 2 + H * 4
                         + H * tile * 2 + tile * 4
                         + Bp * tile * 4)
            vmem_limit = int(min(64 * 2**20,
                                 max(16 * 2**20,
                                     4 * blk_bytes + Bp * H * 4 + (1 << 20))))

            out_padded = pl.pallas_call(
                _hnet_kernel,
                out_shape=jax.ShapeDtypeStruct((Bp, S), jnp.float32),
                grid_spec=grid_spec,
                compiler_params=pltpu.CompilerParams(
                    dimension_semantics=("parallel", "arbitrary"),
                    vmem_limit_bytes=vmem_limit),
            )(hid, cblk, rcmp, x, w1s, b1s, w2s, b2s, w3c, b3c)

            out = out_padded[:B]
            if needs_compact:
                # single pass over ~useful bytes; skipped entirely when every
                # hnet's out_size is already a multiple of the slot tile.
                out = jnp.take(out, gidx, axis=1)
            return out

        return forward

    # ------------------------------------------------------------------
    def __call__(self, x):
        return self._jit_forward(x, self.hid, self.cblk, self.rcmp,
                                 self.w1s, self.b1s, self.w2s, self.b2s,
                                 self.w3c, self.b3c, self.gather_idx)

    # ------------------------------------------------------------------
    def reference(self, x):
        """Plain-JAX reference using the same bf16 weights / f32 accumulation
        as the kernel (validates the kernel, not the quantisation)."""
        xb = x.astype(jnp.bfloat16)
        outs = []
        for (w1, b1, w2, b2, w3, b3) in self.params:
            h = jnp.dot(xb, w1.astype(jnp.bfloat16),
                        preferred_element_type=jnp.float32) + b1
            h = jnp.maximum(h, 0.0)
            h = jnp.dot(h.astype(jnp.bfloat16), w2.astype(jnp.bfloat16),
                        preferred_element_type=jnp.float32) + b2
            h = jnp.maximum(h, 0.0)
            outs.append(jnp.dot(h.astype(jnp.bfloat16), w3.astype(jnp.bfloat16),
                                preferred_element_type=jnp.float32) + b3)
        return jnp.concatenate(outs, axis=1)


if __name__ == "__main__":
    # Synthetic (tiny) SIREN network_spec: 3 target-network layers.
    #   weight shapes are (out_features, in_features), bias shapes (out_features,)
    weight_shapes = [(16, 8), (16, 16), (4, 16)]
    bias_shapes = [(16,), (16,), (4,)]

    in_size = 8        # hypernetwork input (latent code) size
    hidden_size = 32   # hypernetwork hidden width
    batch = 2

    key = jax.random.PRNGKey(0)
    k_params, k_x = jax.random.split(key)

    model = HyperNetworkPallas(k_params, weight_shapes, bias_shapes,
                               in_size=in_size, hidden_size=hidden_size)

    x = jax.random.normal(k_x, (batch, in_size), dtype=jnp.float32)

    out = jax.block_until_ready(model(x))

    expected_cols = sum(int(np.prod(s)) for pair in zip(weight_shapes, bias_shapes)
                        for s in pair)
    assert out.shape == (batch, expected_cols), out.shape

    ref = jax.block_until_ready(model.reference(x))
    assert jnp.allclose(out, ref, atol=1e-5, rtol=1e-3), \
        float(jnp.max(jnp.abs(out - ref)))

    print("KERNEL_OK")
</pallas_src>

<mosaic_0001>
module attributes {stable_mosaic.version = 11 : i64} {
  func.func @_hnet_kernel(%arg0: i32, %arg1: i32, %arg2: memref<8xi32, #tpu.memory_space<smem>>, %arg3: memref<8xi32, #tpu.memory_space<smem>>, %arg4: memref<8xi32, #tpu.memory_space<smem>>, %arg5: memref<8x8xf32, #tpu.memory_space<vmem>>, %arg6: memref<1x8x32xbf16, #tpu.memory_space<vmem>>, %arg7: memref<1x1x32xf32, #tpu.memory_space<vmem>>, %arg8: memref<1x32x32xbf16, #tpu.memory_space<vmem>>, %arg9: memref<1x1x32xf32, #tpu.memory_space<vmem>>, %arg10: memref<32x128xbf16, #tpu.memory_space<vmem>>, %arg11: memref<1x128xf32, #tpu.memory_space<vmem>>, %arg12: memref<8x128xf32, #tpu.memory_space<vmem>>, %arg13: memref<8x32xf32, #tpu.memory_space<vmem>>) attributes {dimension_semantics = [#tpu.dimension_semantics<parallel>, #tpu.dimension_semantics<arbitrary>], iteration_bounds = array<i64: 2, 4>, scalar_prefetch = 3 : i64, scratch_operands = 1 : i64, tpu.core_type = #tpu.core_type<tc>, window_params = [{pipeline_mode = #tpu.pipeline_mode<synchronous>, transform_indices = @transform_0, window_bounds = array<i64: 8, 8>}, {transform_indices = @transform_1, window_bounds = array<i64: 1, 8, 32>}, {transform_indices = @transform_2, window_bounds = array<i64: 1, 1, 32>}, {transform_indices = @transform_3, window_bounds = array<i64: 1, 32, 32>}, {transform_indices = @transform_4, window_bounds = array<i64: 1, 1, 32>}, {transform_indices = @transform_5, window_bounds = array<i64: 32, 128>}, {transform_indices = @transform_6, window_bounds = array<i64: 1, 128>}, {transform_indices = @transform_7, window_bounds = array<i64: 8, 128>}]} {
    %c4_i32 = arith.constant 4 : i32
    %0 = arith.muli %arg0, %c4_i32 : i32
    %1 = arith.addi %0, %arg1 : i32
    %2 = arith.index_cast %1 : i32 to index
    %3 = memref.load %arg4[%2] : memref<8xi32, #tpu.memory_space<smem>>
    %c1_i32 = arith.constant 1 : i32
    %4 = arith.cmpi eq, %3, %c1_i32 : i32
    %5 = arith.extui %4 : i1 to i32
    %c0_i32 = arith.constant 0 : i32
    %6 = arith.cmpi ne, %5, %c0_i32 : i32
    scf.if %6 {
      %c0_7 = arith.constant 0 : index
      %c0_8 = arith.constant 0 : index
      %15 = vector.load %arg5[%c0_7, %c0_8] : memref<8x8xf32, #tpu.memory_space<vmem>>, vector<8x8xf32>
      %16 = arith.truncf %15 : vector<8x8xf32> to vector<8x8xbf16>
      %c0_9 = arith.constant 0 : index
      %c0_10 = arith.constant 0 : index
      %c0_11 = arith.constant 0 : index
      %17 = vector.load %arg6[%c0_9, %c0_10, %c0_11] : memref<1x8x32xbf16, #tpu.memory_space<vmem>>, vector<1x8x32xbf16>
      %18 = vector.shape_cast %17 : vector<1x8x32xbf16> to vector<8x32xbf16>
      %cst_12 = arith.constant dense<0.000000e+00> : vector<8x32xf32>
      %19 = tpu.matmul %16, %18, %cst_12 {dimension_numbers = #tpu.dot_dimension_numbers<[1], [0], [0], [1], [0, 0, 1, 1], [], []>} : vector<8x8xbf16>, vector<8x32xbf16>, vector<8x32xf32> -> vector<8x32xf32>
      %c0_13 = arith.constant 0 : index
      %c0_14 = arith.constant 0 : index
      %c0_15 = arith.constant 0 : index
      %20 = vector.load %arg7[%c0_13, %c0_14, %c0_15] : memref<1x1x32xf32, #tpu.memory_space<vmem>>, vector<1x1x32xf32>
      %21 = vector.shape_cast %20 : vector<1x1x32xf32> to vector<1x32xf32>
      %22 = vector.broadcast %21 : vector<1x32xf32> to vector<8x32xf32>
      %23 = arith.addf %19, %22 : vector<8x32xf32>
      %cst_16 = arith.constant 0.000000e+00 : f32
      %24 = vector.broadcast %cst_16 : f32 to vector<8x32xf32>
      %25 = arith.maximumf %23, %24 : vector<8x32xf32>
      %26 = arith.truncf %25 : vector<8x32xf32> to vector<8x32xbf16>
      %c0_17 = arith.constant 0 : index
      %c0_18 = arith.constant 0 : index
      %c0_19 = arith.constant 0 : index
      %27 = vector.load %arg8[%c0_17, %c0_18, %c0_19] : memref<1x32x32xbf16, #tpu.memory_space<vmem>>, vector<1x32x32xbf16>
      %28 = vector.shape_cast %27 : vector<1x32x32xbf16> to vector<32x32xbf16>
      %cst_20 = arith.constant dense<0.000000e+00> : vector<8x32xf32>
      %29 = tpu.matmul %26, %28, %cst_20 {dimension_numbers = #tpu.dot_dimension_numbers<[1], [0], [0], [1], [0, 0, 1, 1], [], []>} : vector<8x32xbf16>, vector<32x32xbf16>, vector<8x32xf32> -> vector<8x32xf32>
      %c0_21 = arith.constant 0 : index
      %c0_22 = arith.constant 0 : index
      %c0_23 = arith.constant 0 : index
      %30 = vector.load %arg9[%c0_21, %c0_22, %c0_23] : memref<1x1x32xf32, #tpu.memory_space<vmem>>, vector<1x1x32xf32>
      %31 = vector.shape_cast %30 : vector<1x1x32xf32> to vector<1x32xf32>
      %32 = vector.broadcast %31 : vector<1x32xf32> to vector<8x32xf32>
      %33 = arith.addf %29, %32 : vector<8x32xf32>
      %cst_24 = arith.constant 0.000000e+00 : f32
      %34 = vector.broadcast %cst_24 : f32 to vector<8x32xf32>
      %35 = arith.maximumf %33, %34 : vector<8x32xf32>
      %c0_25 = arith.constant 0 : index
      %c0_26 = arith.constant 0 : index
      %36 = vector.load %arg13[%c0_25, %c0_26] : memref<8x32xf32, #tpu.memory_space<vmem>>, vector<8x32xf32>
      tpu.vector_store %arg13[%c0_25, %c0_26], %35 {strides = array<i32>} : memref<8x32xf32, #tpu.memory_space<vmem>>, vector<8x32xf32>,
    } else {
    }
    %c0 = arith.constant 0 : index
    %c0_0 = arith.constant 0 : index
    %7 = vector.load %arg13[%c0, %c0_0] : memref<8x32xf32, #tpu.memory_space<vmem>>, vector<8x32xf32>
    %8 = arith.truncf %7 : vector<8x32xf32> to vector<8x32xbf16>
    %c0_1 = arith.constant 0 : index
    %c0_2 = arith.constant 0 : index
    %9 = vector.load %arg10[%c0_1, %c0_2] : memref<32x128xbf16, #tpu.memory_space<vmem>>, vector<32x128xbf16>
    %cst = arith.constant dense<0.000000e+00> : vector<8x128xf32>
    %10 = tpu.matmul %8, %9, %cst {dimension_numbers = #tpu.dot_dimension_numbers<[1], [0], [0], [1], [0, 0, 1, 1], [], []>} : vector<8x32xbf16>, vector<32x128xbf16>, vector<8x128xf32> -> vector<8x128xf32>
    %c0_3 = arith.constant 0 : index
    %c0_4 = arith.constant 0 : index
    %11 = vector.load %arg11[%c0_3, %c0_4] : memref<1x128xf32, #tpu.memory_space<vmem>>, vector<1x128xf32>
    %12 = vector.broadcast %11 : vector<1x128xf32> to vector<8x128xf32>
    %13 = arith.addf %10, %12 : vector<8x128xf32>
    %c0_5 = arith.constant 0 : index
    %c0_6 = arith.constant 0 : index
    %14 = vector.load %arg12[%c0_5, %c0_6] : memref<8x128xf32, #tpu.memory_space<vmem>>, vector<8x128xf32>
    tpu.vector_store %arg12[%c0_5, %c0_6], %13 {strides = array<i32>} : memref<8x128xf32, #tpu.memory_space<vmem>>, vector<8x128xf32>,
    return
  }
  func.func @transform_0(%arg0: i32, %arg1: i32, %arg2: memref<8xi32, #tpu.memory_space<smem>>, %arg3: memref<8xi32, #tpu.memory_space<smem>>, %arg4: memref<8xi32, #tpu.memory_space<smem>>) -> (i32, i32) {
    %c0_i32 = arith.constant 0 : i32
    %c0_i32_0 = arith.constant 0 : i32
    %c0_i32_1 = arith.constant 0 : i32
    return %c0_i32, %c0_i32_0 : i32, i32
  }
  func.func @transform_1(%arg0: i32, %arg1: i32, %arg2: memref<8xi32, #tpu.memory_space<smem>>, %arg3: memref<8xi32, #tpu.memory_space<smem>>, %arg4: memref<8xi32, #tpu.memory_space<smem>>) -> (i32, i32, i32) {
    %c4_i32 = arith.constant 4 : i32
    %0 = arith.muli %arg0, %c4_i32 : i32
    %1 = arith.addi %0, %arg1 : i32
    %2 = arith.index_cast %1 : i32 to index
    %3 = memref.load %arg2[%2] : memref<8xi32, #tpu.memory_space<smem>>
    %c0_i32 = arith.constant 0 : i32
    %c0_i32_0 = arith.constant 0 : i32
    %c0_i32_1 = arith.constant 0 : i32
    return %3, %c0_i32, %c0_i32_0 : i32, i32, i32
  }
  func.func @transform_2(%arg0: i32, %arg1: i32, %arg2: memref<8xi32, #tpu.memory_space<smem>>, %arg3: memref<8xi32, #tpu.memory_space<smem>>, %arg4: memref<8xi32, #tpu.memory_space<smem>>) -> (i32, i32, i32) {
    %c4_i32 = arith.constant 4 : i32
    %0 = arith.muli %arg0, %c4_i32 : i32
    %1 = arith.addi %0, %arg1 : i32
    %2 = arith.index_cast %1 : i32 to index
    %3 = memref.load %arg2[%2] : memref<8xi32, #tpu.memory_space<smem>>
    %c0_i32 = arith.constant 0 : i32
    %c0_i32_0 = arith.constant 0 : i32
    %c0_i32_1 = arith.constant 0 : i32
    return %3, %c0_i32, %c0_i32_0 : i32, i32, i32
  }
  func.func @transform_3(%arg0: i32, %arg1: i32, %arg2: memref<8xi32, #tpu.memory_space<smem>>, %arg3: memref<8xi32, #tpu.memory_space<smem>>, %arg4: memref<8xi32, #tpu.memory_space<smem>>) -> (i32, i32, i32) {
    %c4_i32 = arith.constant 4 : i32
    %0 = arith.muli %arg0, %c4_i32 : i32
    %1 = arith.addi %0, %arg1 : i32
    %2 = arith.index_cast %1 : i32 to index
    %3 = memref.load %arg2[%2] : memref<8xi32, #tpu.memory_space<smem>>
    %c0_i32 = arith.constant 0 : i32
    %c0_i32_0 = arith.constant 0 : i32
    %c0_i32_1 = arith.constant 0 : i32
    return %3, %c0_i32, %c0_i32_0 : i32, i32, i32
  }
  func.func @transform_4(%arg0: i32, %arg1: i32, %arg2: memref<8xi32, #tpu.memory_space<smem>>, %arg3: memref<8xi32, #tpu.memory_space<smem>>, %arg4: memref<8xi32, #tpu.memory_space<smem>>) -> (i32, i32, i32) {
    %c4_i32 = arith.constant 4 : i32
    %0 = arith.muli %arg0, %c4_i32 : i32
    %1 = arith.addi %0, %arg1 : i32
    %2 = arith.index_cast %1 : i32 to index
    %3 = memref.load %arg2[%2] : memref<8xi32, #tpu.memory_space<smem>>
    %c0_i32 = arith.constant 0 : i32
    %c0_i32_0 = arith.constant 0 : i32
    %c0_i32_1 = arith.constant 0 : i32
    return %3, %c0_i32, %c0_i32_0 : i32, i32, i32
  }
  func.func @transform_5(%arg0: i32, %arg1: i32, %arg2: memref<8xi32, #tpu.memory_space<smem>>, %arg3: memref<8xi32, #tpu.memory_space<smem>>, %arg4: memref<8xi32, #tpu.memory_space<smem>>) -> (i32, i32) {
    %c4_i32 = arith.constant 4 : i32
    %0 = arith.muli %arg0, %c4_i32 : i32
    %1 = arith.addi %0, %arg1 : i32
    %2 = arith.index_cast %1 : i32 to index
    %3 = memref.load %arg3[%2] : memref<8xi32, #tpu.memory_space<smem>>
    %c0_i32 = arith.constant 0 : i32
    %c0_i32_0 = arith.constant 0 : i32
    return %c0_i32, %3 : i32, i32
  }
  func.func @transform_6(%arg0: i32, %arg1: i32, %arg2: memref<8xi32, #tpu.memory_space<smem>>, %arg3: memref<8xi32, #tpu.memory_space<smem>>, %arg4: memref<8xi32, #tpu.memory_space<smem>>) -> (i32, i32) {
    %c4_i32 = arith.constant 4 : i32
    %0 = arith.muli %arg0, %c4_i32 : i32
    %1 = arith.addi %0, %arg1 : i32
    %2 = arith.index_cast %1 : i32 to index
    %3 = memref.load %arg3[%2] : memref<8xi32, #tpu.memory_space<smem>>
    %c0_i32 = arith.constant 0 : i32
    %c0_i32_0 = arith.constant 0 : i32
    return %c0_i32, %3 : i32, i32
  }
  func.func @transform_7(%arg0: i32, %arg1: i32, %arg2: memref<8xi32, #tpu.memory_space<smem>>, %arg3: memref<8xi32, #tpu.memory_space<smem>>, %arg4: memref<8xi32, #tpu.memory_space<smem>>) -> (i32, i32) {
    %c4_i32 = arith.constant 4 : i32
    %0 = arith.muli %arg0, %c4_i32 : i32
    %1 = arith.addi %0, %arg1 : i32
    %2 = arith.index_cast %1 : i32 to index
    %3 = memref.load %arg3[%2] : memref<8xi32, #tpu.memory_space<smem>>
    %c0_i32 = arith.constant 0 : i32
    %c0_i32_0 = arith.constant 0 : i32
    return %c0_i32, %3 : i32, i32
  }
}

</mosaic_0001>

<llo_original>
// kernel: forward.1
$region0: #{forward.1}
  #allocation0 [shape = 'u32[]', space=smem, size = 0x4, offset = 0x4, fixed_abs, tag = 'smem constant byte address 0x4 - core index']
  #allocation1 [shape = 'u32[72,128]{1,0:T(1,128)}', space=vmem, size = 0x9000, scoped, tag = 'internal scratch']
  #allocation2 [shape = 'f32[8,32]{1,0:T(8,128)}', space=vmem, size = 0x1000, scoped, tag = 'scratch operand']
  #allocation3 [shape = 's32[1]{0}', space=sflag, size = 0x4, scoped, tag = 'scoped memory for forward.1']
  #allocation4 [shape = 'u8[512]{0}', space=smem, size = 0x200, scoped, tag = 'prefetched SMEM operand 0']
  #allocation5 [shape = 'u8[512]{0}', space=smem, size = 0x200, scoped, tag = 'prefetched SMEM operand 1']
  #allocation6 [shape = 'u8[512]{0}', space=smem, size = 0x200, scoped, tag = 'prefetched SMEM operand 2']
  %s0 = inlined_call_operand.vmem [shape: s32[8], index: 0, kind: input, shape index: {}]
  %s1 = inlined_call_operand.vmem [shape: s32[8], index: 1, kind: input, shape index: {}]
  %s2 = inlined_call_operand.vmem [shape: s32[8], index: 2, kind: input, shape index: {}]
  %s3 = inlined_call_operand.vmem [shape: f32[8,8], index: 3, kind: input, shape index: {}]
  %s4 = inlined_call_operand.hbm [shape: bf16[6,8,32], index: 4, kind: input, shape index: {}]
  %s5 = inlined_call_operand.vmem [shape: f32[6,1,32], index: 5, kind: input, shape index: {}]
  %s6 = inlined_call_operand.hbm [shape: bf16[6,32,32], index: 6, kind: input, shape index: {}]
  %s7 = inlined_call_operand.hbm [shape: f32[6,1,32], index: 7, kind: input, shape index: {}]
  %s8 = inlined_call_operand.hbm [shape: bf16[32,896], index: 8, kind: input, shape index: {}]
  %s9 = inlined_call_operand.vmem [shape: f32[1,896], index: 9, kind: input, shape index: {}]
  %s10 = inlined_call_operand.vmem [shape: f32[8,896], index: 10, kind: output, shape index: {}]
  %s11 = sld [smem:[#allocation0]]
  $region81: #{forward.1} parent=0
    _
  %s13 = ssub.s32 1, %s11
  %s14 = scalar_select 0, %s13, %s11
  %s16 = sshll.u32 %s0, 4
  %s17 = int_to_ptr.vmem [resolvable:$true] %s16
  %19 = dma.vmem_to_smem %s17, 16, [#allocation4], [#allocation3]
  %s21 = sshll.u32 %s1, 4
  %s22 = int_to_ptr.vmem [resolvable:$true] %s21
  %24 = dma.vmem_to_smem %s22, 16, [#allocation5], [#allocation3]
  %s26 = sshll.u32 %s2, 4
  %s27 = int_to_ptr.vmem [resolvable:$true] %s26
  %29 = dma.vmem_to_smem %s27, 16, [#allocation6], [#allocation3]
  %31 = dma.done [#allocation3], 48
  %32 = sfence
  $region1: #{forward.1} parent=0
    #allocation7 [shape = 'u8[4096]{0}', space=vmem, size = 0x1000, scoped, tag = 'input window, operand 4']
    #allocation8 [shape = 's32[2]{0}', space=sflag, size = 0x8, scoped, tag = 'scoped memory for forward.1']
    #allocation9 [shape = 'u8[16384]{0}', space=vmem, size = 0x4000, scoped, tag = 'input window, operand 6']
    #allocation10 [shape = 's32[2]{0}', space=sflag, size = 0x8, scoped, tag = 'scoped memory for forward.1']
    #allocation11 [shape = 'u8[1024]{0}', space=vmem, size = 0x400, scoped, tag = 'input window, operand 7']
    #allocation12 [shape = 'u8[16384]{0}', space=vmem, size = 0x4000, scoped, tag = 'input window, operand 8']
    #allocation13 [shape = 's32[2]{0}', space=sflag, size = 0x8, scoped, tag = 'scoped memory for forward.1']
    %33 = vsyncpa [#allocation8], 0
    %s34 = scalar_lea.sflag [#allocation8], 1
    %35 = vsyncpa %s34, 0
    %36 = vsyncpa [#allocation10], 0
    %s37 = scalar_lea.sflag [#allocation10], 1
    %38 = vsyncpa %s37, 0
    %39 = vsyncpa [#allocation13], 0
    %s40 = scalar_lea.sflag [#allocation13], 1
    %41 = vsyncpa %s40, 0
    loop: start=0, step=1, limit=10
    $region2: #{forward.1} parent=1 // loop_pre_header
      _
    $region3: #{forward.1} parent=1 // loop_header
      %s43 = sphi 0, %s47
      %p44 = scmp.ge.s32.totalorder %s43, 10
      %s50 = sphi 0, %s62
      %s51 = sphi 0, %s58
      %s52 = sphi 0, %s50
      %s53 = sphi 0, %s51
      %s54 = sphi 0, %s52
      %s55 = sphi 0, %s53
      %s63 = sphi 0, %s63
      %s65 = sphi 0, %s63
      %s66 = sphi 0, %s65
      %s80 = sphi 0, %s66
      %s92 = sphi 0, %s94
      %s95 = sphi 0, %s92
      %s96 = sphi 0, %s95
      %s112 = sphi 0, %s96
      %s124 = sphi 0, %s126
      %s127 = sphi 0, %s124
      %s128 = sphi 0, %s127
      %s144 = sphi 0, %s128
      %s156 = sphi 0, %s158
      %s159 = sphi 0, %s156
      %s160 = sphi 0, %s159
      %s176 = sphi 0, %s160
      %s188 = sphi 0, %s190
      %s191 = sphi 0, %s188
      %s192 = sphi 0, %s191
      %s208 = sphi 0, %s192
      %s220 = sphi 0, %s222
      %s223 = sphi 0, %s220
      %s224 = sphi 0, %s223
      %s240 = sphi 0, %s224
      %s252 = sphi 0, %s254
      %s255 = sphi 0, %s252
      %s256 = sphi 0, %s255
      %s272 = sphi 0, %s256
      %s284 = sphi 0, %s286
      %s287 = sphi 0, %s284
      %s288 = sphi 0, %s287
      %s304 = sphi 0, %s288
    $region4: #{forward.1} parent=1 // loop_header_branch
      %46 = sbr.rel (%p44) target = $region8
    $region5: #{forward.1} parent=1 // loop_body
      %s48 = ssub.s32 %s43, 1
      %s49 = ssub.s32 %s43, 2
      %s56 = sadd.s32 1, %s51
      %p57 = scmp.ge.s32.totalorder %s56, 4
      %s58 = scalar_select %p57, 0, %s56
      %s59 = sadd.s32 1, %s50
      %s60 = scalar_select %p57, %s59, %s50
      %p61 = scmp.ge.s32.totalorder %s60, 2
      %s62 = scalar_select %p61, 0, %s60
      %s64 = sadd.s32 %s63, 1
      %p67 = scmp.eq.s32.totalorder %s43, 7
      %p68 = scmp.ne.s32.totalorder %s63, %s65
      %p69 = scmp.eq.s32.totalorder %s43, 0
      %p70 = por %p68, %p69
      %p71 = scmp.ne.s32.totalorder %s63, %s65
      %p72 = scmp.eq.s32.totalorder %s48, 7
      %p73 = por %p71, %p72
      %p74 = scmp.ne.s32.totalorder %s65, %s66
      %p75 = scmp.eq.s32.totalorder %s48, 0
      %p76 = por %p74, %p75
      %p77 = scmp.ne.s32.totalorder %s65, %s66
      %p78 = scmp.eq.s32.totalorder %s49, 7
      %p79 = por %p77, %p78
      %p81 = scmp.ne.s32.totalorder %s66, %s80
      %p82 = scmp.eq.s32.totalorder %s49, 0
      %p83 = por %p81, %p82
      %s84 = smul.u32 %s50, 4
      %s85 = sadd.s32 %s84, %s51
      %s86 = sld [smem:[#allocation4 + %s85]]
      %s87 = smul.u32 %s62, 4
      %s88 = sadd.s32 %s87, %s58
      %s89 = sld [smem:[#allocation4 + %s88]]
      %s90 = ssub.s32 %s86, %s89
      %p91 = scmp.eq.s32.totalorder %s90, 0
      %s93 = sadd.s32 %s92, 1
      %s94 = scalar_select %p91, %s92, %s93
      %p97 = pneg %p91
      %p98 = scmp.eq.s32.totalorder %s43, 7
      %p99 = por %p97, %p98
      %p100 = scmp.ne.s32.totalorder %s92, %s95
      %p101 = scmp.eq.s32.totalorder %s43, 0
      %p102 = por %p100, %p101
      %p103 = scmp.ne.s32.totalorder %s92, %s95
      %p104 = scmp.eq.s32.totalorder %s48, 7
      %p105 = por %p103, %p104
      %p106 = scmp.ne.s32.totalorder %s95, %s96
      %p107 = scmp.eq.s32.totalorder %s48, 0
      %p108 = por %p106, %p107
      %p109 = scmp.ne.s32.totalorder %s95, %s96
      %p110 = scmp.eq.s32.totalorder %s49, 7
      %p111 = por %p109, %p110
      %p113 = scmp.ne.s32.totalorder %s96, %s112
      %p114 = scmp.eq.s32.totalorder %s49, 0
      %p115 = por %p113, %p114
      %s116 = smul.u32 %s50, 4
      %s117 = sadd.s32 %s116, %s51
      %s118 = sld [smem:[#allocation4 + %s117]]
      %s119 = smul.u32 %s62, 4
      %s120 = sadd.s32 %s119, %s58
      %s121 = sld [smem:[#allocation4 + %s120]]
      %s122 = ssub.s32 %s118, %s121
      %p123 = scmp.eq.s32.totalorder %s122, 0
      %s125 = sadd.s32 %s124, 1
      %s126 = scalar_select %p123, %s124, %s125
      %p129 = pneg %p123
      %p130 = scmp.eq.s32.totalorder %s43, 7
      %p131 = por %p129, %p130
      %p132 = scmp.ne.s32.totalorder %s124, %s127
      %p133 = scmp.eq.s32.totalorder %s43, 0
      %p134 = por %p132, %p133
      %p135 = scmp.ne.s32.totalorder %s124, %s127
      %p136 = scmp.eq.s32.totalorder %s48, 7
      %p137 = por %p135, %p136
      %p138 = scmp.ne.s32.totalorder %s127, %s128
      %p139 = scmp.eq.s32.totalorder %s48, 0
      %p140 = por %p138, %p139
      %p141 = scmp.ne.s32.totalorder %s127, %s128
      %p142 = scmp.eq.s32.totalorder %s49, 7
      %p143 = por %p141, %p142
      %p145 = scmp.ne.s32.totalorder %s128, %s144
      %p146 = scmp.eq.s32.totalorder %s49, 0
      %p147 = por %p145, %p146
      %s148 = smul.u32 %s50, 4
      %s149 = sadd.s32 %s148, %s51
      %s150 = sld [smem:[#allocation4 + %s149]]
      %s151 = smul.u32 %s62, 4
      %s152 = sadd.s32 %s151, %s58
      %s153 = sld [smem:[#allocation4 + %s152]]
      %s154 = ssub.s32 %s150, %s153
      %p155 = scmp.eq.s32.totalorder %s154, 0
      %s157 = sadd.s32 %s156, 1
      %s158 = scalar_select %p155, %s156, %s157
      %p161 = pneg %p155
      %p162 = scmp.eq.s32.totalorder %s43, 7
      %p163 = por %p161, %p162
      %p164 = scmp.ne.s32.totalorder %s156, %s159
      %p165 = scmp.eq.s32.totalorder %s43, 0
      %p166 = por %p164, %p165
      %p167 = scmp.ne.s32.totalorder %s156, %s159
      %p168 = scmp.eq.s32.totalorder %s48, 7
      %p169 = por %p167, %p168
      %p170 = scmp.ne.s32.totalorder %s159, %s160
      %p171 = scmp.eq.s32.totalorder %s48, 0
      %p172 = por %p170, %p171
      %p173 = scmp.ne.s32.totalorder %s159, %s160
      %p174 = scmp.eq.s32.totalorder %s49, 7
      %p175 = por %p173, %p174
      %p177 = scmp.ne.s32.totalorder %s160, %s176
      %p178 = scmp.eq.s32.totalorder %s49, 0
      %p179 = por %p177, %p178
      %s180 = smul.u32 %s50, 4
      %s181 = sadd.s32 %s180, %s51
      %s182 = sld [smem:[#allocation4 + %s181]]
      %s183 = smul.u32 %s62, 4
      %s184 = sadd.s32 %s183, %s58
      %s185 = sld [smem:[#allocation4 + %s184]]
      %s186 = ssub.s32 %s182, %s185
      %p187 = scmp.eq.s32.totalorder %s186, 0
      %s189 = sadd.s32 %s188, 1
      %s190 = scalar_select %p187, %s188, %s189
      %p193 = pneg %p187
      %p194 = scmp.eq.s32.totalorder %s43, 7
      %p195 = por %p193, %p194
      %p196 = scmp.ne.s32.totalorder %s188, %s191
      %p197 = scmp.eq.s32.totalorder %s43, 0
      %p198 = por %p196, %p197
      %p199 = scmp.ne.s32.totalorder %s188, %s191
      %p200 = scmp.eq.s32.totalorder %s48, 7
      %p201 = por %p199, %p200
      %p202 = scmp.ne.s32.totalorder %s191, %s192
      %p203 = scmp.eq.s32.totalorder %s48, 0
      %p204 = por %p202, %p203
      %p205 = scmp.ne.s32.totalorder %s191, %s192
      %p206 = scmp.eq.s32.totalorder %s49, 7
      %p207 = por %p205, %p206
      %p209 = scmp.ne.s32.totalorder %s192, %s208
      %p210 = scmp.eq.s32.totalorder %s49, 0
      %p211 = por %p209, %p210
      %s212 = smul.u32 %s50, 4
      %s213 = sadd.s32 %s212, %s51
      %s214 = sld [smem:[#allocation5 + %s213]]
      %s215 = smul.u32 %s62, 4
      %s216 = sadd.s32 %s215, %s58
      %s217 = sld [smem:[#allocation5 + %s216]]
      %s218 = ssub.s32 %s214, %s217
      %p219 = scmp.eq.s32.totalorder %s218, 0
      %s221 = sadd.s32 %s220, 1
      %s222 = scalar_select %p219, %s220, %s221
      %p225 = pneg %p219
      %p226 = scmp.eq.s32.totalorder %s43, 7
      %p227 = por %p225, %p226
      %p228 = scmp.ne.s32.totalorder %s220, %s223
      %p229 = scmp.eq.s32.totalorder %s43, 0
      %p230 = por %p228, %p229
      %p231 = scmp.ne.s32.totalorder %s220, %s223
      %p232 = scmp.eq.s32.totalorder %s48, 7
      %p233 = por %p231, %p232
      %p234 = scmp.ne.s32.totalorder %s223, %s224
      %p235 = scmp.eq.s32.totalorder %s48, 0
      %p236 = por %p234, %p235
      %p237 = scmp.ne.s32.totalorder %s223, %s224
      %p238 = scmp.eq.s32.totalorder %s49, 7
      %p239 = por %p237, %p238
      %p241 = scmp.ne.s32.totalorder %s224, %s240
      %p242 = scmp.eq.s32.totalorder %s49, 0
      %p243 = por %p241, %p242
      %s244 = smul.u32 %s50, 4
      %s245 = sadd.s32 %s244, %s51
      %s246 = sld [smem:[#allocation5 + %s245]]
      %s247 = smul.u32 %s62, 4
      %s248 = sadd.s32 %s247, %s58
      %s249 = sld [smem:[#allocation5 + %s248]]
      %s250 = ssub.s32 %s246, %s249
      %p251 = scmp.eq.s32.totalorder %s250, 0
      %s253 = sadd.s32 %s252, 1
      %s254 = scalar_select %p251, %s252, %s253
      %p257 = pneg %p251
      %p258 = scmp.eq.s32.totalorder %s43, 7
      %p259 = por %p257, %p258
      %p260 = scmp.ne.s32.totalorder %s252, %s255
      %p261 = scmp.eq.s32.totalorder %s43, 0
      %p262 = por %p260, %p261
      %p263 = scmp.ne.s32.totalorder %s252, %s255
      %p264 = scmp.eq.s32.totalorder %s48, 7
      %p265 = por %p263, %p264
      %p266 = scmp.ne.s32.totalorder %s255, %s256
      %p267 = scmp.eq.s32.totalorder %s48, 0
      %p268 = por %p266, %p267
      %p269 = scmp.ne.s32.totalorder %s255, %s256
      %p270 = scmp.eq.s32.totalorder %s49, 7
      %p271 = por %p269, %p270
      %p273 = scmp.ne.s32.totalorder %s256, %s272
      %p274 = scmp.eq.s32.totalorder %s49, 0
      %p275 = por %p273, %p274
      %s276 = smul.u32 %s50, 4
      %s277 = sadd.s32 %s276, %s51
      %s278 = sld [smem:[#allocation5 + %s277]]
      %s279 = smul.u32 %s62, 4
      %s280 = sadd.s32 %s279, %s58
      %s281 = sld [smem:[#allocation5 + %s280]]
      %s282 = ssub.s32 %s278, %s281
      %p283 = scmp.eq.s32.totalorder %s282, 0
      %s285 = sadd.s32 %s284, 1
      %s286 = scalar_select %p283, %s284, %s285
      %p289 = pneg %p283
      %p290 = scmp.eq.s32.totalorder %s43, 7
      %p291 = por %p289, %p290
      %p292 = scmp.ne.s32.totalorder %s284, %s287
      %p293 = scmp.eq.s32.totalorder %s43, 0
      %p294 = por %p292, %p293
      %p295 = scmp.ne.s32.totalorder %s284, %s287
      %p296 = scmp.eq.s32.totalorder %s48, 7
      %p297 = por %p295, %p296
      %p298 = scmp.ne.s32.totalorder %s287, %s288
      %p299 = scmp.eq.s32.totalorder %s48, 0
      %p300 = por %p298, %p299
      %p301 = scmp.ne.s32.totalorder %s287, %s288
      %p302 = scmp.eq.s32.totalorder %s49, 7
      %p303 = por %p301, %p302
      %p305 = scmp.ne.s32.totalorder %s288, %s304
      %p306 = scmp.eq.s32.totalorder %s49, 0
      %p307 = por %p305, %p306
      %p308 = scmp.le.s32.totalorder 1, %s43
      %p309 = scmp.lt.s32.totalorder %s43, 9
      %p310 = pnand %p308, %p309
      %p311 = pneg %p310
      // Predicated region
      $region9: #{forward.1} parent=5 // pred_check
        _
      $region10: #{forward.1} parent=5 // pred_check_branch
        %313 = sbr.rel (%p310) target = $region12
      $region11: #{forward.1} parent=5 // pred_region
        %s314 = ssub.s32 %s43, 1
        // Predicated region
        $region13: #{forward.1} parent=11 // pred_check
          %p315 = pneg %p76
        $region14: #{forward.1} parent=11 // pred_check_branch
          %317 = sbr.rel (%p315) target = $region16
        $region15: #{forward.1} parent=11 // pred_region
          _
        $region16: #{forward.1} parent=11 // pred_fallthru
          _
      $region12: #{forward.1} parent=5 // pred_fallthru
        _
      %p318 = scmp.lt.s32.totalorder %s43, 8
      // Predicated region
      $region17: #{forward.1} parent=5 // pred_check
        %p319 = pneg %p318
      $region18: #{forward.1} parent=5 // pred_check_branch
        %321 = sbr.rel (%p319) target = $region20
      $region19: #{forward.1} parent=5 // pred_region
        // Predicated region
        $region21: #{forward.1} parent=19 // pred_check
          %p322 = pneg %p102
        $region22: #{forward.1} parent=19 // pred_check_branch
          %324 = sbr.rel (%p322) target = $region24
        $region23: #{forward.1} parent=19 // pred_region
          %s325 = sand.u32 %s92, 1
          %s326 = scalar_lea.sflag [#allocation8], %s325
          %s327 = sand.u32 %s92, 1
          %s328 = smul.addr %s327, 4
          %s329 = scalar_lea.vmem [#allocation7], %s328
          %s330 = smul.u32 %s50, 4
          %s331 = sadd.s32 %s330, %s51
          %s332 = sld [smem:[#allocation4 + %s331]]
          %334 = vsyncadd %s326, 0
          %s335 = smul.addr %s332, 4
          %s336 = scalar_lea.hbm %s4, %s335
          %s338 = sshll.u32 %s336, 4
          %s339 = int_to_ptr.hbm [resolvable:$true] %s338
          %s340 = sshll.u32 %s329, 4
          %s341 = int_to_ptr.vmem [resolvable:$true] %s340
          %343 = dma.hbm_to_vmem [thread:$0]  %s339, 64, %s341, %s326
        $region24: #{forward.1} parent=19 // pred_fallthru
          _
        // Predicated region
        $region25: #{forward.1} parent=19 // pred_check
          %p344 = pneg %p134
        $region26: #{forward.1} parent=19 // pred_check_branch
          %346 = sbr.rel (%p344) target = $region28
        $region27: #{forward.1} parent=19 // pred_region
          %s347 = smul.u32 %s50, 4
          %s348 = sadd.s32 %s347, %s51
          %s349 = sld [smem:[#allocation4 + %s348]]
          %p350 = scmp.lt.s32.totalorder %s349, 5
          %s351 = scalar_select %p350, %s349, 5
          %s352 = scalar_lea.vmem %s5, %s351
          %s353 = smul.u32 %s50, 4
          %s354 = sadd.s32 %s353, %s51
          %s355 = sld [smem:[#allocation4 + %s354]]
        $region28: #{forward.1} parent=19 // pred_fallthru
          _
        // Predicated region
        $region29: #{forward.1} parent=19 // pred_check
          %p356 = pneg %p166
        $region30: #{forward.1} parent=19 // pred_check_branch
          %358 = sbr.rel (%p356) target = $region32
        $region31: #{forward.1} parent=19 // pred_region
          %s359 = sand.u32 %s43, 1
          %s360 = scalar_lea.sflag [#allocation10], %s359
          %s361 = sand.u32 %s156, 1
          %s362 = smul.addr %s361, 16
          %s363 = scalar_lea.vmem [#allocation9], %s362
          %s364 = smul.u32 %s50, 4
          %s365 = sadd.s32 %s364, %s51
          %s366 = sld [smem:[#allocation4 + %s365]]
          %368 = vsyncadd %s360, 0
          %s369 = smul.addr %s366, 4
          %s370 = smul.addr %s369, 4
          %s371 = scalar_lea.hbm %s6, %s370
          %s372 = sshll.u32 %s371, 4
          %s373 = int_to_ptr.hbm [resolvable:$true] %s372
          %s374 = sshll.u32 %s363, 4
          %s375 = int_to_ptr.vmem [resolvable:$true] %s374
          %380 = dma.hbm_to_vmem [thread:$0]  %s373, 256, %s375, %s360, 64, 64, 4
        $region32: #{forward.1} parent=19 // pred_fallthru
          _
        // Predicated region
        $region33: #{forward.1} parent=19 // pred_check
          %p381 = pneg %p198
        $region34: #{forward.1} parent=19 // pred_check_branch
          %383 = sbr.rel (%p381) target = $region36
        $region35: #{forward.1} parent=19 // pred_region
          %s384 = sand.u32 %s43, 1
          %s385 = scalar_lea.sflag [#allocation10], %s384
          %s386 = sand.u32 %s188, 1
          %s387 = scalar_lea.vmem [#allocation11], %s386
          %s388 = smul.u32 %s50, 4
          %s389 = sadd.s32 %s388, %s51
          %s390 = sld [smem:[#allocation4 + %s389]]
          %392 = vsyncadd %s385, 0
          %s393 = scalar_lea.hbm %s7, %s390
          %s395 = sshll.u32 %s393, 4
          %s396 = int_to_ptr.hbm [resolvable:$true] %s395
          %s397 = sshll.u32 %s387, 4
          %s398 = int_to_ptr.vmem [resolvable:$true] %s397
          %400 = dma.hbm_to_vmem [thread:$0]  %s396, 16, %s398, %s385
        $region36: #{forward.1} parent=19 // pred_fallthru
          _
        // Predicated region
        $region37: #{forward.1} parent=19 // pred_check
          %p401 = pneg %p230
        $region38: #{forward.1} parent=19 // pred_check_branch
          %403 = sbr.rel (%p401) target = $region40
        $region39: #{forward.1} parent=19 // pred_region
          %s404 = sand.u32 %s220, 1
          %s405 = scalar_lea.sflag [#allocation13], %s404
          %s406 = sand.u32 %s220, 1
          %s407 = smul.addr %s406, 16
          %s408 = scalar_lea.vmem [#allocation12], %s407
          %s409 = smul.u32 %s50, 4
          %s410 = sadd.s32 %s409, %s51
          %s411 = sld [smem:[#allocation5 + %s410]]
          %413 = vsyncadd %s405, 0
          %s414 = smul.addr %s411, 4
          %s415 = scalar_lea.hbm %s8, %s414
          %s416 = sshll.u32 %s415, 4
          %s417 = int_to_ptr.hbm [resolvable:$true] %s416
          %s418 = sshll.u32 %s408, 4
          %s419 = int_to_ptr.vmem [resolvable:$true] %s418
          %424 = dma.hbm_to_vmem [thread:$0]  %s417, 256, %s419, %s405, 448, 64, 4
        $region40: #{forward.1} parent=19 // pred_fallthru
          _
        // Predicated region
        $region41: #{forward.1} parent=19 // pred_check
          %p425 = pneg %p262
        $region42: #{forward.1} parent=19 // pred_check_branch
          %427 = sbr.rel (%p425) target = $region44
        $region43: #{forward.1} parent=19 // pred_region
          %s428 = smul.u32 %s50, 4
          %s429 = sadd.s32 %s428, %s51
          %s430 = sld [smem:[#allocation5 + %s429]]
          %p431 = scmp.lt.s32.totalorder %s430, 6
          %s432 = scalar_select %p431, %s430, 6
          %s433 = scalar_lea.vmem %s9, %s432
          %s434 = smul.u32 %s50, 4
          %s435 = sadd.s32 %s434, %s51
          %s436 = sld [smem:[#allocation5 + %s435]]
        $region44: #{forward.1} parent=19 // pred_fallthru
          _
      $region20: #{forward.1} parent=5 // pred_fallthru
        _
      %p437 = scmp.le.s32.totalorder 1, %s43
      %p438 = scmp.lt.s32.totalorder %s43, 9
      %p439 = pnand %p437, %p438
      %p440 = pneg %p439
      // Predicated region
      $region45: #{forward.1} parent=5 // pred_check
        _
      $region46: #{forward.1} parent=5 // pred_check_branch
        %442 = sbr.rel (%p439) target = $region48
      $region47: #{forward.1} parent=5 // pred_region
        %s443 = ssub.s32 %s43, 1
        %s444 = sand.u32 %s95, 1
        %s445 = scalar_lea.sflag [#allocation8], %s444
        %s446 = sand.u32 %s95, 1
        %s447 = smul.addr %s446, 4
        %s448 = scalar_lea.vmem [#allocation7], %s447
        // Predicated region
        $region49: #{forward.1} parent=47 // pred_check
          %p449 = pneg %p108
        $region50: #{forward.1} parent=47 // pred_check_branch
          %451 = sbr.rel (%p449) target = $region52
        $region51: #{forward.1} parent=47 // pred_region
          %453 = dma.done %s445, 64
        $region52: #{forward.1} parent=47 // pred_fallthru
          _
        %s454 = sand.u32 %s48, 1
        %s455 = scalar_lea.sflag [#allocation10], %s454
        %s456 = sand.u32 %s159, 1
        %s457 = smul.addr %s456, 16
        %s458 = scalar_lea.vmem [#allocation9], %s457
        // Predicated region
        $region53: #{forward.1} parent=47 // pred_check
          %p459 = pneg %p172
        $region54: #{forward.1} parent=47 // pred_check_branch
          %461 = sbr.rel (%p459) target = $region56
        $region55: #{forward.1} parent=47 // pred_region
          %463 = dma.done %s455, 256
        $region56: #{forward.1} parent=47 // pred_fallthru
          _
        %s464 = sand.u32 %s48, 1
        %s465 = scalar_lea.sflag [#allocation10], %s464
        %s466 = sand.u32 %s191, 1
        %s467 = scalar_lea.vmem [#allocation11], %s466
        // Predicated region
        $region57: #{forward.1} parent=47 // pred_check
          %p468 = pneg %p204
        $region58: #{forward.1} parent=47 // pred_check_branch
          %470 = sbr.rel (%p468) target = $region60
        $region59: #{forward.1} parent=47 // pred_region
          %472 = dma.done %s465, 16
        $region60: #{forward.1} parent=47 // pred_fallthru
          _
        %s473 = sand.u32 %s223, 1
        %s474 = scalar_lea.sflag [#allocation13], %s473
        %s475 = sand.u32 %s223, 1
        %s476 = smul.addr %s475, 16
        %s477 = scalar_lea.vmem [#allocation12], %s476
        // Predicated region
        $region61: #{forward.1} parent=47 // pred_check
          %p478 = pneg %p236
        $region62: #{forward.1} parent=47 // pred_check_branch
          %480 = sbr.rel (%p478) target = $region64
        $region63: #{forward.1} parent=47 // pred_region
          %482 = dma.done %s474, 256
        $region64: #{forward.1} parent=47 // pred_fallthru
          _
        %p483 = pneg %p76
        %p484 = pneg %p73
        %s485 = sand.u32 %s95, 1
        %s486 = scalar_lea.sflag [#allocation8], %s485
        %s487 = sand.u32 %s95, 1
        %s488 = smul.addr %s487, 4
        %s489 = scalar_lea.vmem [#allocation7], %s488
        %p490 = pneg %p108
        %p491 = pneg %p105
        %s492 = smul.u32 %s52, 4
        %s493 = sadd.s32 %s492, %s53
        %s494 = sld [smem:[#allocation4 + %s493]]
        %p495 = scmp.lt.s32.totalorder %s494, 5
        %s496 = scalar_select %p495, %s494, 5
        %s497 = scalar_lea.vmem %s5, %s496
        %p498 = pneg %p140
        %p499 = pneg %p137
        %s500 = sand.u32 %s48, 1
        %s501 = scalar_lea.sflag [#allocation10], %s500
        %s502 = sand.u32 %s159, 1
        %s503 = smul.addr %s502, 16
        %s504 = scalar_lea.vmem [#allocation9], %s503
        %p505 = pneg %p172
        %p506 = pneg %p169
        %s507 = sand.u32 %s48, 1
        %s508 = scalar_lea.sflag [#allocation10], %s507
        %s509 = sand.u32 %s191, 1
        %s510 = scalar_lea.vmem [#allocation11], %s509
        %p511 = pneg %p204
        %p512 = pneg %p201
        %s513 = sand.u32 %s223, 1
        %s514 = scalar_lea.sflag [#allocation13], %s513
        %s515 = sand.u32 %s223, 1
        %s516 = smul.addr %s515, 16
        %s517 = scalar_lea.vmem [#allocation12], %s516
        %p518 = pneg %p236
        %p519 = pneg %p233
        %s520 = smul.u32 %s52, 4
        %s521 = sadd.s32 %s520, %s53
        %s522 = sld [smem:[#allocation5 + %s521]]
        %p523 = scmp.lt.s32.totalorder %s522, 6
        %s524 = scalar_select %p523, %s522, 6
        %s525 = scalar_lea.vmem %s9, %s524
        %p526 = pneg %p268
        %p527 = pneg %p265
        %p528 = pneg %p300
        %p529 = pneg %p297
        %s530 = smul.u32 %s52, 4
        %s531 = sadd.s32 %s530, %s53
        %s532 = sld [smem:[#allocation5 + %s531]]
        %p533 = scmp.lt.s32.totalorder %s532, 6
        %s534 = scalar_select %p533, %s532, 6
        %s535 = smul.addr %s534, 8
        %s536 = scalar_lea.vmem %s10, %s535
        %s537 = smul.u32 %s52, 4
        %s538 = sadd.s32 %s537, %s53
        %s539 = sld [smem:[#allocation4 + %s538]]
        %s540 = smul.u32 %s52, 4
        %s541 = sadd.s32 %s540, %s53
        %s542 = sld [smem:[#allocation4 + %s541]]
        %p543 = scmp.lt.s32.totalorder %s542, 5
        %s544 = scalar_select %p543, %s542, 5
        %s545 = scalar_lea.vmem %s5, %s544
        %s546 = smul.u32 %s52, 4
        %s547 = sadd.s32 %s546, %s53
        %s548 = sld [smem:[#allocation4 + %s547]]
        %s549 = smul.u32 %s52, 4
        %s550 = sadd.s32 %s549, %s53
        %s551 = sld [smem:[#allocation4 + %s550]]
        %s552 = smul.u32 %s52, 4
        %s553 = sadd.s32 %s552, %s53
        %s554 = sld [smem:[#allocation4 + %s553]]
        %s555 = smul.u32 %s52, 4
        %s556 = sadd.s32 %s555, %s53
        %s557 = sld [smem:[#allocation5 + %s556]]
        %s558 = smul.u32 %s52, 4
        %s559 = sadd.s32 %s558, %s53
        %s560 = sld [smem:[#allocation5 + %s559]]
        %p561 = scmp.lt.s32.totalorder %s560, 6
        %s562 = scalar_select %p561, %s560, 6
        %s563 = scalar_lea.vmem %s9, %s562
        %s564 = smul.u32 %s52, 4
        %s565 = sadd.s32 %s564, %s53
        %s566 = sld [smem:[#allocation5 + %s565]]
        %s567 = smul.u32 %s52, 4
        %s568 = sadd.s32 %s567, %s53
        %s569 = sld [smem:[#allocation5 + %s568]]
        %p570 = scmp.lt.s32.totalorder %s569, 6
        %s571 = scalar_select %p570, %s569, 6
        %s572 = smul.addr %s571, 8
        %s573 = scalar_lea.vmem %s10, %s572
        %s574 = smul.u32 %s52, 4
        %s575 = sadd.s32 %s574, %s53
        %s576 = sld [smem:[#allocation5 + %s575]]
        %s578 = smul.u32 %s52, 4
        %s579 = sadd.s32 %s578, %s53
        %s580 = sld [smem:[#allocation6 + %s579]]
        %p581 = scmp.eq.s32.totalorder %s580, 1
        // Predicated region
        $region65: #{forward.1} parent=47 // pred_check
          %p582 = pneg %p581
        $region66: #{forward.1} parent=47 // pred_check_branch
          %584 = sbr.rel (%p582) target = $region68
        $region67: #{forward.1} parent=47 // pred_region
          %v585 = vld [vmem:[%s3] sm:$0xff]
          %v586 = vpack.c.bf16 %v585, %v585
          %v587 = vld [vmem:[%s448] sm:$0xf]
          %v588 = vld [vmem:[%s545] sm:$0x1]
          %v590 = vperm.slane %v588, 0
          %vm592 = vcmask 64512
          %v594 = vsel %vm592, %v586, 0
          %vm596 = vcmask 1043456
          %v598 = vsel %vm596, %v587, 0
          %600 = vmatpush.bf16.msra.mxu0 0
          %601 = vmatpush.bf16.msra.mxu0 0
          %602 = vmatpush.bf16.msra.mxu0 0
          %603 = vmatpush.bf16.msra.mxu0 0
          %604 = vmatpush.bf16.msra.mxu0 0
          %605 = vmatpush.bf16.msra.mxu0 0
          %606 = vmatpush.bf16.msra.mxu0 0
          %607 = vmatpush.bf16.msra.mxu0 %v598
          %608 = vmatmul.bf16.gmra.mxu0 %v594
          %v609 = vpop.f32.mrf.mxu0
          %v610 = vadd.f32 %v590, %v609
          %v611 = vpop.f32.mrf.mxu0
          %612 = vdwg.mxu0
          %v613 = vmax.f32 %v610, 0.0
          %v614 = vpack.c.bf16 %v613, %v613
          %v615 = vld [vmem:[%s458] sm:$0xf]
          %v616 = vld [vmem:[%s458 + $0x4] sm:$0xf]
          %v617 = vld [vmem:[%s458 + $0x8] sm:$0xf]
          %v618 = vld [vmem:[%s458 + $0xc] sm:$0xf]
          %v619 = vld [vmem:[%s467] sm:$0x1]
          %v621 = vperm.slane %v619, 0
          %v627 = vunpack.c.l.b16 %v615
          %v628 = vunpack.c.l.b16 %v616
          %v629 = vunpack.c.l.b16 %v617
          %v630 = vunpack.c.l.b16 %v618
          %v631 = vpack.c.b16 %v628, %v627
          %v632 = vpack.c.b16 %v630, %v629
          %vm635 = vcmask 261120
          %v637 = vsel %vm635, %v614, 0
          %639 = vmatpush.bf16.msra.mxu0 0
          %640 = vmatpush.bf16.msra.mxu0 0
          %641 = vmatpush.bf16.msra.mxu0 0
          %642 = vmatpush.bf16.msra.mxu0 0
          %643 = vmatpush.bf16.msra.mxu0 0
          %644 = vmatpush.bf16.msra.mxu0 0
          %645 = vmatpush.bf16.msra.mxu0 %v632
          %646 = vmatpush.bf16.msra.mxu0 %v631
          %647 = vmatmul.bf16.gmra.mxu0 %v637
          %v648 = vpop.f32.mrf.mxu0
          %v649 = vadd.f32 %v621, %v648
          %v650 = vpop.f32.mrf.mxu0
          %651 = vdwg.mxu0
          %v652 = vmax.f32 %v649, 0.0
          %653 = vst.msk [vmem:[#allocation2] sm:$0xff] %vm635, %v652
        $region68: #{forward.1} parent=47 // pred_fallthru
          _
        %v654 = vld [vmem:[#allocation2] sm:$0xff]
        %v655 = vpack.c.bf16 %v654, %v654
        %v656 = vld [vmem:[%s477] sm:$0xf]
        %v657 = vld [vmem:[%s477 + $0x4] sm:$0xf]
        %v658 = vld [vmem:[%s477 + $0x8] sm:$0xf]
        %v659 = vld [vmem:[%s477 + $0xc] sm:$0xf]
        %v660 = vld [vmem:[%s563] sm:$0x1]
        %v662 = vperm.slane %v660, 0
        %v668 = vunpack.c.l.b16 %v656
        %v669 = vunpack.c.l.b16 %v657
        %v670 = vunpack.c.l.b16 %v658
        %v671 = vunpack.c.l.b16 %v659
        %v672 = vpack.c.b16 %v669, %v668
        %v673 = vpack.c.b16 %v671, %v670
        %vm676 = vcmask 261120
        %v678 = vsel %vm676, %v655, 0
        %680 = vmatpush.bf16.msra.mxu0 0
        %681 = vmatpush.bf16.msra.mxu0 0
        %682 = vmatpush.bf16.msra.mxu0 0
        %683 = vmatpush.bf16.msra.mxu0 0
        %684 = vmatpush.bf16.msra.mxu0 0
        %685 = vmatpush.bf16.msra.mxu0 0
        %686 = vmatpush.bf16.msra.mxu0 %v673
        %687 = vmatpush.bf16.msra.mxu0 %v672
        %688 = vmatmul.bf16.gmra.mxu0 %v678
        %v689 = vpop.f32.mrf.mxu0
        %v690 = vadd.f32 %v662, %v689
        %v691 = vpop.f32.mrf.mxu0
        %692 = vdwg.mxu0
        %693 = vst [vmem:[%s573] sm:$0xff] %v690
        %s694 = smul.u32 %s52, 4
        %s695 = sadd.s32 %s694, %s53
        %s696 = sld [smem:[#allocation5 + %s695]]
        %p697 = scmp.lt.s32.totalorder %s696, 6
        %s698 = scalar_select %p697, %s696, 6
        %s699 = smul.addr %s698, 8
        %s700 = scalar_lea.vmem %s10, %s699
        // Predicated region
        $region69: #{forward.1} parent=47 // pred_check
          %p701 = pneg %p297
        $region70: #{forward.1} parent=47 // pred_check_branch
          %703 = sbr.rel (%p701) target = $region72
        $region71: #{forward.1} parent=47 // pred_region
          %s704 = smul.u32 %s52, 4
          %s705 = sadd.s32 %s704, %s53
          %s706 = sld [smem:[#allocation5 + %s705]]
        $region72: #{forward.1} parent=47 // pred_fallthru
          _
      $region48: #{forward.1} parent=5 // pred_fallthru
        _
      %p707 = scmp.le.s32.totalorder 2, %s43
      // Predicated region
      $region73: #{forward.1} parent=5 // pred_check
        %p708 = pneg %p707
      $region74: #{forward.1} parent=5 // pred_check_branch
        %710 = sbr.rel (%p708) target = $region76
      $region75: #{forward.1} parent=5 // pred_region
        %s711 = ssub.s32 %s43, 2
        // Predicated region
        $region77: #{forward.1} parent=75 // pred_check
          %p712 = pneg %p303
        $region78: #{forward.1} parent=75 // pred_check_branch
          %714 = sbr.rel (%p712) target = $region80
        $region79: #{forward.1} parent=75 // pred_region
          %s715 = smul.u32 %s54, 4
          %s716 = sadd.s32 %s715, %s55
          %s717 = sld [smem:[#allocation5 + %s716]]
          %p718 = scmp.lt.s32.totalorder %s717, 6
          %s719 = scalar_select %p718, %s717, 6
          %s720 = smul.addr %s719, 8
          %s721 = scalar_lea.vmem %s10, %s720
        $region80: #{forward.1} parent=75 // pred_fallthru
          _
      $region76: #{forward.1} parent=5 // pred_fallthru
        _
    $region6: #{forward.1} parent=1 // loop_footer
      %s47 = sadd.s32 1, %s43
    $region7: #{forward.1} parent=1 // loop_footer_branch
      %42 = sbr.rel target = $region3
    $region8: #{forward.1} parent=1 // loop_exit
      _
    %722 = vsyncpa [#allocation8], 1
    %s723 = scalar_lea.sflag [#allocation8], 1
    %724 = vsyncpa %s723, 1
    %725 = vsyncpa [#allocation10], 1
    %s726 = scalar_lea.sflag [#allocation10], 1
    %727 = vsyncpa %s726, 1
    %728 = vsyncpa [#allocation13], 1
    %s729 = scalar_lea.sflag [#allocation13], 1
    %730 = vsyncpa %s729, 1

</llo_original>
